<compile_context>
chip_gen: v5e
topology: v5e:2x2
jax: 0.10.0
libtpu: 0.0.40
codegen_flags: <defaults>
</compile_context>

<pallas_src>
import functools

import jax
import jax.numpy as jnp
from jax.experimental import pallas as pl
from jax.experimental.pallas import tpu as pltpu

LANE = 128
SUB = 8


def _dice_kernel(x_ref, t_ref, o_ref, *, block_rows):
    """Grid = (num_blocks,) ["arbitrary" reduction axis].

    x_ref / t_ref: (block_rows, 128) tiles of the flattened inputs/targets.
    o_ref: (3, 8, 128) f32 accumulator, VMEM-resident across the whole grid:
      slab 0: per-bin partial sum of sigmoid(x) * t   (intersection)
      slab 1: per-bin partial sum of sigmoid(x)
      slab 2: per-bin partial sum of t
    Every tile handed to the kernel is fully valid -> no masking at all.
    """
    i = pl.program_id(0)

    @pl.when(i == 0)
    def _init():
        o_ref[...] = jnp.zeros_like(o_ref)

    x = x_ref[...].astype(jnp.float32)
    t = t_ref[...].astype(jnp.float32)
    # sigmoid(x) == 0.5 * tanh(0.5 * x) + 0.5: keeps the transcendental on the
    # EUP slot and avoids an exact f32 divide expanding into extra VALU ops.
    p = jnp.tanh(x * 0.5) * 0.5 + 0.5

    def fold(v):
        # (block_rows, 128) -> (block_rows//8, 8, 128) is layout-preserving
        # (groups whole (8,128) vregs), so the row reduction is a plain tree
        # of full-vreg adds into an (8,128) slab: no cross-sublane XLU work
        # and no masked single-sublane read-modify-write stores.
        return jnp.sum(v.reshape(block_rows // SUB, SUB, LANE), axis=0)

    # NOTE: the review suggested offloading these row sums to the MXU via a
    # ones((8, block_rows)) @ block matmul; that formulation streams the
    # *data* tile through the MXU as weights (weight-load bound), so the plain
    # VALU adds (3 per data vreg, well within the HBM delivery rate) are kept.
    o_ref[0, :, :] += fold(p * t)
    o_ref[1, :, :] += fold(p)
    o_ref[2, :, :] += fold(t)


def dice_loss(inputs, targets, smooth=1.0, *, tile_rows=8192):
    """Pallas implementation of DiceLoss.forward (returns a scalar f32).

    Inputs/targets may be any float (or binary) dtype; they are streamed in
    their native dtype and upcast to f32 inside the kernel (so bf16 targets
    halve that HBM stream). Keep `tile_rows` a multiple of 16 (bf16) /
    32 (int8) when using sub-f32 dtypes with multi-tile inputs.
    """
    x = inputs.reshape(-1)
    t = targets.reshape(-1)
    n = x.shape[0]

    chunk = SUB * LANE                       # 1024: keeps rows a multiple of 8
    n_main = (n // chunk) * chunk

    tile_rows = max(SUB, (int(tile_rows) // SUB) * SUB)

    n_kernel = 0
    if n_main > 0:
        rows = n_main // LANE                # multiple of 8
        block_rows = min(tile_rows, rows)    # multiple of 8
        num_blocks = rows // block_rows      # whole tiles only
        rows_k = num_blocks * block_rows
        n_kernel = rows_k * LANE

        # Prefix slice only on ragged sizes (no full-array pad copy).
        x_k = x if n_kernel == n else x[:n_kernel]
        t_k = t if n_kernel == n else t[:n_kernel]
        x2 = x_k.reshape(rows_k, LANE)
        t2 = t_k.reshape(rows_k, LANE)

        # Double-buffered pipeline: 2 inputs x 2 buffers x one tile each.
        in_bytes = 2 * block_rows * LANE * (x2.dtype.itemsize + t2.dtype.itemsize)
        vmem_limit = int(min(48 * 2**20, max(32 * 2**20, in_bytes + (4 << 20))))

        out = pl.pallas_call(
            functools.partial(_dice_kernel, block_rows=block_rows),
            out_shape=jax.ShapeDtypeStruct((3, SUB, LANE), jnp.float32),
            grid=(num_blocks,),
            in_specs=[
                pl.BlockSpec((block_rows, LANE), lambda i: (i, 0)),
                pl.BlockSpec((block_rows, LANE), lambda i: (i, 0)),
            ],
            out_specs=pl.BlockSpec((3, SUB, LANE), lambda i: (0, 0, 0)),
            compiler_params=pltpu.CompilerParams(
                dimension_semantics=("arbitrary",),
                vmem_limit_bytes=vmem_limit,
            ),
        )(x2, t2)

        intersection = jnp.sum(out[0])
        p_sum = jnp.sum(out[1])
        t_sum = jnp.sum(out[2])
    else:
        intersection = jnp.float32(0.0)
        p_sum = jnp.float32(0.0)
        t_sum = jnp.float32(0.0)

    if n_kernel < n:
        # Ragged remainder: tiny plain-jnp epilogue instead of padding/masking
        # the whole stream.
        x_tail = x[n_kernel:].astype(jnp.float32)
        t_tail = t[n_kernel:].astype(jnp.float32)
        p_tail = jnp.tanh(x_tail * 0.5) * 0.5 + 0.5
        intersection = intersection + jnp.sum(p_tail * t_tail)
        p_sum = p_sum + jnp.sum(p_tail)
        t_sum = t_sum + jnp.sum(t_tail)

    smooth = jnp.float32(smooth)
    dice = (2.0 * intersection + smooth) / (p_sum + t_sum + smooth)
    return (1.0 - dice).astype(jnp.float32)


def dice_loss_ref(inputs, targets, smooth=1.0):
    """Pure-JAX reference (mirrors the PyTorch forward)."""
    p = jax.nn.sigmoid(inputs.astype(jnp.float32)).reshape(-1)
    t = targets.astype(jnp.float32).reshape(-1)
    intersection = jnp.sum(p * t)
    dice = (2.0 * intersection + smooth) / (jnp.sum(p) + jnp.sum(t) + smooth)
    return 1.0 - dice


if __name__ == "__main__":
    key = jax.random.PRNGKey(0)
    k1, k2 = jax.random.split(key)

    # Primary check: NCHW segmentation-style shape (B, C, H, W), aligned size
    # (single exact block, no tail).
    x = jax.random.normal(k1, (2, 4, 16, 16), dtype=jnp.float32)
    targets = (jax.random.uniform(k2, (2, 4, 16, 16)) > 0.5).astype(jnp.float32)
    loss = jax.block_until_ready(dice_loss(x, targets, smooth=1.0))
    ref = jax.block_until_ready(dice_loss_ref(x, targets, smooth=1.0))
    assert jnp.allclose(loss, ref, atol=1e-5, rtol=1e-5), (loss, ref)

    # Ragged size: kernel handles the aligned bulk, jnp epilogue the tail.
    k3, k4 = jax.random.split(k1)
    x_rag = jax.random.normal(k3, (2, 4, 16, 17), dtype=jnp.float32)
    t_rag = (jax.random.uniform(k4, (2, 4, 16, 17)) > 0.5).astype(jnp.float32)
    loss_rag = jax.block_until_ready(dice_loss(x_rag, t_rag, smooth=1.0))
    ref_rag = jax.block_until_ready(dice_loss_ref(x_rag, t_rag, smooth=1.0))
    assert jnp.allclose(loss_rag, ref_rag, atol=1e-5, rtol=1e-5), (loss_rag, ref_rag)

    # Multi-block accumulation path + row-remainder epilogue (small tile_rows
    # forces several grid steps).
    k5, k6 = jax.random.split(k2)
    x_mb = jax.random.normal(k5, (2, 4, 32, 32), dtype=jnp.float32)
    t_mb = (jax.random.uniform(k6, (2, 4, 32, 32)) > 0.5).astype(jnp.float32)
    loss_mb = jax.block_until_ready(dice_loss(x_mb, t_mb, smooth=1.0, tile_rows=24))
    ref_mb = jax.block_until_ready(dice_loss_ref(x_mb, t_mb, smooth=1.0))
    assert jnp.allclose(loss_mb, ref_mb, atol=1e-5, rtol=1e-5), (loss_mb, ref_mb)

    # Tiny input (< 1024 elems): pure epilogue path, no kernel launch.
    k7, k8 = jax.random.split(k5)
    x_tiny = jax.random.normal(k7, (2, 3, 7, 5), dtype=jnp.float32)
    t_tiny = (jax.random.uniform(k8, (2, 3, 7, 5)) > 0.5).astype(jnp.float32)
    loss_tiny = jax.block_until_ready(dice_loss(x_tiny, t_tiny, smooth=1.0))
    ref_tiny = jax.block_until_ready(dice_loss_ref(x_tiny, t_tiny, smooth=1.0))
    assert jnp.allclose(loss_tiny, ref_tiny, atol=1e-5, rtol=1e-5), (loss_tiny, ref_tiny)

    # Native-bf16 pass-through (kernel upcasts internally; no wrapper convert).
    x_bf = x.astype(jnp.bfloat16)
    t_bf = targets.astype(jnp.bfloat16)
    loss_bf = jax.block_until_ready(dice_loss(x_bf, t_bf, smooth=1.0))
    ref_bf = jax.block_until_ready(dice_loss_ref(x_bf, t_bf, smooth=1.0))
    assert jnp.allclose(loss_bf, ref_bf, atol=1e-4, rtol=1e-4), (loss_bf, ref_bf)

    print("KERNEL_OK")
</pallas_src>

<mosaic_0001>
module attributes {stable_mosaic.version = 11 : i64} {
  func.func @_dice_kernel(%arg0: i32, %arg1: memref<16x128xf32, #tpu.memory_space<vmem>>, %arg2: memref<16x128xf32, #tpu.memory_space<vmem>>, %arg3: memref<3x8x128xf32, #tpu.memory_space<vmem>>) attributes {dimension_semantics = [#tpu.dimension_semantics<arbitrary>], iteration_bounds = array<i64: 1>, scalar_prefetch = 0 : i64, scratch_operands = 0 : i64, tpu.core_type = #tpu.core_type<tc>, window_params = [{transform_indices = @transform_0, window_bounds = array<i64: 16, 128>}, {transform_indices = @transform_1, window_bounds = array<i64: 16, 128>}, {pipeline_mode = #tpu.pipeline_mode<synchronous>, transform_indices = @transform_2, window_bounds = array<i64: 3, 8, 128>}]} {
    %c0_i32 = arith.constant 0 : i32
    %0 = arith.cmpi eq, %arg0, %c0_i32 : i32
    %1 = arith.extui %0 : i1 to i32
    %c0_i32_0 = arith.constant 0 : i32
    %2 = arith.cmpi ne, %1, %c0_i32_0 : i32
    scf.if %2 {
      %cst_25 = arith.constant 0.000000e+00 : f32
      %37 = vector.broadcast %cst_25 : f32 to vector<3x8x128xf32>
      %c0_26 = arith.constant 0 : index
      %c0_27 = arith.constant 0 : index
      %c0_28 = arith.constant 0 : index
      %38 = vector.load %arg3[%c0_26, %c0_27, %c0_28] : memref<3x8x128xf32, #tpu.memory_space<vmem>>, vector<3x8x128xf32>
      tpu.vector_store %arg3[%c0_26, %c0_27, %c0_28], %37 {strides = array<i32>} : memref<3x8x128xf32, #tpu.memory_space<vmem>>, vector<3x8x128xf32>,
    } else {
    }
    %c0 = arith.constant 0 : index
    %c0_1 = arith.constant 0 : index
    %3 = vector.load %arg1[%c0, %c0_1] : memref<16x128xf32, #tpu.memory_space<vmem>>, vector<16x128xf32>
    %c0_2 = arith.constant 0 : index
    %c0_3 = arith.constant 0 : index
    %4 = vector.load %arg2[%c0_2, %c0_3] : memref<16x128xf32, #tpu.memory_space<vmem>>, vector<16x128xf32>
    %cst = arith.constant 5.000000e-01 : f32
    %5 = vector.broadcast %cst : f32 to vector<16x128xf32>
    %6 = arith.mulf %3, %5 : vector<16x128xf32>
    %7 = math.tanh %6 : vector<16x128xf32>
    %cst_4 = arith.constant 5.000000e-01 : f32
    %8 = vector.broadcast %cst_4 : f32 to vector<16x128xf32>
    %9 = arith.mulf %7, %8 : vector<16x128xf32>
    %cst_5 = arith.constant 5.000000e-01 : f32
    %10 = vector.broadcast %cst_5 : f32 to vector<16x128xf32>
    %11 = arith.addf %9, %10 : vector<16x128xf32>
    %c0_6 = arith.constant 0 : index
    %c0_7 = arith.constant 0 : index
    %c0_8 = arith.constant 0 : index
    %12 = vector.load %arg3[%c0_6, %c0_7, %c0_8] : memref<3x8x128xf32, #tpu.memory_space<vmem>>, vector<1x8x128xf32>
    %13 = vector.shape_cast %12 : vector<1x8x128xf32> to vector<8x128xf32>
    %14 = arith.mulf %11, %4 : vector<16x128xf32>
    %15 = vector.shape_cast %14 : vector<16x128xf32> to vector<2x8x128xf32>
    %cst_9 = arith.constant dense<0.000000e+00> : vector<8x128xf32>
    %16 = vector.multi_reduction <add>, %15, %cst_9 [0] : vector<2x8x128xf32> to vector<8x128xf32>
    %17 = arith.addf %13, %16 : vector<8x128xf32>
    %c0_10 = arith.constant 0 : index
    %c0_11 = arith.constant 0 : index
    %c0_12 = arith.constant 0 : index
    %18 = vector.load %arg3[%c0_10, %c0_11, %c0_12] : memref<3x8x128xf32, #tpu.memory_space<vmem>>, vector<1x8x128xf32>
    %19 = vector.shape_cast %18 : vector<1x8x128xf32> to vector<8x128xf32>
    %20 = vector.shape_cast %17 : vector<8x128xf32> to vector<1x8x128xf32>
    tpu.vector_store %arg3[%c0_10, %c0_11, %c0_12], %20 {strides = array<i32>} : memref<3x8x128xf32, #tpu.memory_space<vmem>>, vector<1x8x128xf32>,
    %c1 = arith.constant 1 : index
    %c0_13 = arith.constant 0 : index
    %c0_14 = arith.constant 0 : index
    %21 = vector.load %arg3[%c1, %c0_13, %c0_14] : memref<3x8x128xf32, #tpu.memory_space<vmem>>, vector<1x8x128xf32>
    %22 = vector.shape_cast %21 : vector<1x8x128xf32> to vector<8x128xf32>
    %23 = vector.shape_cast %11 : vector<16x128xf32> to vector<2x8x128xf32>
    %cst_15 = arith.constant dense<0.000000e+00> : vector<8x128xf32>
    %24 = vector.multi_reduction <add>, %23, %cst_15 [0] : vector<2x8x128xf32> to vector<8x128xf32>
    %25 = arith.addf %22, %24 : vector<8x128xf32>
    %c1_16 = arith.constant 1 : index
    %c0_17 = arith.constant 0 : index
    %c0_18 = arith.constant 0 : index
    %26 = vector.load %arg3[%c1_16, %c0_17, %c0_18] : memref<3x8x128xf32, #tpu.memory_space<vmem>>, vector<1x8x128xf32>
    %27 = vector.shape_cast %26 : vector<1x8x128xf32> to vector<8x128xf32>
    %28 = vector.shape_cast %25 : vector<8x128xf32> to vector<1x8x128xf32>
    tpu.vector_store %arg3[%c1_16, %c0_17, %c0_18], %28 {strides = array<i32>} : memref<3x8x128xf32, #tpu.memory_space<vmem>>, vector<1x8x128xf32>,
    %c2 = arith.constant 2 : index
    %c0_19 = arith.constant 0 : index
    %c0_20 = arith.constant 0 : index
    %29 = vector.load %arg3[%c2, %c0_19, %c0_20] : memref<3x8x128xf32, #tpu.memory_space<vmem>>, vector<1x8x128xf32>
    %30 = vector.shape_cast %29 : vector<1x8x128xf32> to vector<8x128xf32>
    %31 = vector.shape_cast %4 : vector<16x128xf32> to vector<2x8x128xf32>
    %cst_21 = arith.constant dense<0.000000e+00> : vector<8x128xf32>
    %32 = vector.multi_reduction <add>, %31, %cst_21 [0] : vector<2x8x128xf32> to vector<8x128xf32>
    %33 = arith.addf %30, %32 : vector<8x128xf32>
    %c2_22 = arith.constant 2 : index
    %c0_23 = arith.constant 0 : index
    %c0_24 = arith.constant 0 : index
    %34 = vector.load %arg3[%c2_22, %c0_23, %c0_24] : memref<3x8x128xf32, #tpu.memory_space<vmem>>, vector<1x8x128xf32>
    %35 = vector.shape_cast %34 : vector<1x8x128xf32> to vector<8x128xf32>
    %36 = vector.shape_cast %33 : vector<8x128xf32> to vector<1x8x128xf32>
    tpu.vector_store %arg3[%c2_22, %c0_23, %c0_24], %36 {strides = array<i32>} : memref<3x8x128xf32, #tpu.memory_space<vmem>>, vector<1x8x128xf32>,
    return
  }
  func.func @transform_0(%arg0: i32) -> (i32, i32) {
    %c0_i32 = arith.constant 0 : i32
    %c0_i32_0 = arith.constant 0 : i32
    return %arg0, %c0_i32 : i32, i32
  }
  func.func @transform_1(%arg0: i32) -> (i32, i32) {
    %c0_i32 = arith.constant 0 : i32
    %c0_i32_0 = arith.constant 0 : i32
    return %arg0, %c0_i32 : i32, i32
  }
  func.func @transform_2(%arg0: i32) -> (i32, i32, i32) {
    %c0_i32 = arith.constant 0 : i32
    %c0_i32_0 = arith.constant 0 : i32
    %c0_i32_1 = arith.constant 0 : i32
    %c0_i32_2 = arith.constant 0 : i32
    return %c0_i32, %c0_i32_0, %c0_i32_1 : i32, i32, i32
  }
}

</mosaic_0001>

<llo_original>
// kernel: tpu_custom_call.1
$region0: #{tpu_custom_call.1}
  #allocation0 [shape = 'u32[]', space=smem, size = 0x4, offset = 0x4, fixed_abs, tag = 'smem constant byte address 0x4 - core index']
  #allocation1 [shape = 'u32[72,128]{1,0:T(1,128)}', space=vmem, size = 0x9000, scoped, tag = 'internal scratch']
  %s0 = inlined_call_operand.hbm [shape: f32[16,128], index: 0, kind: input, shape index: {}]
  %s1 = inlined_call_operand.hbm [shape: f32[16,128], index: 1, kind: input, shape index: {}]
  %s2 = inlined_call_operand.hbm [shape: f32[3,8,128], index: 2, kind: output, shape index: {}]
  %s3 = sld [smem:[#allocation0]]
  $region30: #{tpu_custom_call.1} parent=0
    _
  %s5 = ssub.s32 1, %s3
  %s6 = scalar_select 0, %s5, %s3
  $region1: #{tpu_custom_call.1} parent=0
    #allocation2 [shape = 'u8[8192]{0}', space=vmem, size = 0x2000, scoped, tag = 'input window, operand 0, single buffered']
    #allocation3 [shape = 's32[1]{0}', space=sflag, size = 0x4, scoped, tag = 'scoped memory for tpu_custom_call.1']
    #allocation4 [shape = 's32[1]{0}', space=sflag, size = 0x4, scoped, tag = 'scoped memory for tpu_custom_call.1']
    #allocation5 [shape = 'u8[8192]{0}', space=vmem, size = 0x2000, scoped, tag = 'input window, operand 1, single buffered']
    #allocation6 [shape = 's32[1]{0}', space=sflag, size = 0x4, scoped, tag = 'scoped memory for tpu_custom_call.1']
    #allocation7 [shape = 'u8[12288]{0}', space=vmem, size = 0x3000, scoped, tag = 'output window, operand 0, single buffered']
    %7 = vsyncpa [#allocation3], 0
    %8 = vsyncpa [#allocation6], 0
    %9 = vsyncpa [#allocation4], 0
    // Predicated region
    $region2: #{tpu_custom_call.1} parent=1 // pred_check
      _
    $region3: #{tpu_custom_call.1} parent=1 // pred_check_branch
      %11 = sbr.rel (0) target = $region5
    $region4: #{tpu_custom_call.1} parent=1 // pred_region
      %13 = vsyncadd [#allocation3], 0
      %s14 = sshll.u32 %s0, 4
      %s15 = int_to_ptr.hbm [resolvable:$true] %s14
      %s16 = sshll.u32 [#allocation2], 4
      %s17 = int_to_ptr.vmem [resolvable:$true] %s16
      %22 = dma.hbm_to_vmem [thread:$0]  %s15, 256, %s17, [#allocation3], 128, 128, 8
    $region5: #{tpu_custom_call.1} parent=1 // pred_fallthru
      _
    // Predicated region
    $region6: #{tpu_custom_call.1} parent=1 // pred_check
      _
    $region7: #{tpu_custom_call.1} parent=1 // pred_check_branch
      %24 = sbr.rel (0) target = $region9
    $region8: #{tpu_custom_call.1} parent=1 // pred_region
      %26 = vsyncadd [#allocation6], 0
      %s27 = sshll.u32 %s1, 4
      %s28 = int_to_ptr.hbm [resolvable:$true] %s27
      %s29 = sshll.u32 [#allocation5], 4
      %s30 = int_to_ptr.vmem [resolvable:$true] %s29
      %35 = dma.hbm_to_vmem [thread:$0]  %s28, 256, %s30, [#allocation6], 128, 128, 8
    $region9: #{tpu_custom_call.1} parent=1 // pred_fallthru
      _
    // Predicated region
    $region10: #{tpu_custom_call.1} parent=1 // pred_check
      _
    $region11: #{tpu_custom_call.1} parent=1 // pred_check_branch
      %37 = sbr.rel (0) target = $region13
    $region12: #{tpu_custom_call.1} parent=1 // pred_region
      %39 = dma.done [#allocation3], 256
    $region13: #{tpu_custom_call.1} parent=1 // pred_fallthru
      _
    // Predicated region
    $region14: #{tpu_custom_call.1} parent=1 // pred_check
      _
    $region15: #{tpu_custom_call.1} parent=1 // pred_check_branch
      %41 = sbr.rel (0) target = $region17
    $region16: #{tpu_custom_call.1} parent=1 // pred_region
      %43 = dma.done [#allocation6], 256
    $region17: #{tpu_custom_call.1} parent=1 // pred_fallthru
      _
    %p44 = scmp.eq.s32.totalorder 0, 0
    // Predicated region
    $region18: #{tpu_custom_call.1} parent=1 // pred_check
      %p45 = pneg %p44
    $region19: #{tpu_custom_call.1} parent=1 // pred_check_branch
      %47 = sbr.rel (%p45) target = $region21
    $region20: #{tpu_custom_call.1} parent=1 // pred_region
      %48 = vst [vmem:[#allocation7] sm:$0xff] 0.0
      %49 = vst [vmem:[#allocation7 + $0x8] sm:$0xff] 0.0
      %50 = vst [vmem:[#allocation7 + $0x10] sm:$0xff] 0.0
    $region21: #{tpu_custom_call.1} parent=1 // pred_fallthru
      _
    %v51 = vld [vmem:[#allocation2] sm:$0xff]
    %v52 = vld [vmem:[#allocation2 + $0x8] sm:$0xff]
    %v53 = vld [vmem:[#allocation5] sm:$0xff]
    %v54 = vld [vmem:[#allocation5 + $0x8] sm:$0xff]
    %v55 = vmul.f32 %v51, 0.5
    %v56 = vmul.f32 %v52, 0.5
    %v57 = vtanh.pop %v55
    %v58 = vtanh.pop %v56
    %v59 = vmul.f32 %v57, 0.5
    %v60 = vmul.f32 %v58, 0.5
    %v61 = vadd.f32 %v59, 0.5
    %v62 = vadd.f32 %v60, 0.5
    %v63 = vld [vmem:[#allocation7] sm:$0xff]
    %v64 = vmul.f32 %v61, %v53
    %v65 = vmul.f32 %v62, %v54
    %v66 = vadd.f32 %v64, %v65
    %v67 = vadd.f32 %v63, %v66
    %68 = vst [vmem:[#allocation7] sm:$0xff] %v67
    %s69 = scalar_lea.vmem [#allocation7], 8
    %v70 = vld [vmem:[%s69] sm:$0xff]
    %v71 = vadd.f32 %v61, %v62
    %v72 = vadd.f32 %v70, %v71
    %73 = vst [vmem:[%s69] sm:$0xff] %v72
    %s74 = scalar_lea.vmem [#allocation7], 16
    %v75 = vld [vmem:[%s74] sm:$0xff]
    %v76 = vadd.f32 %v53, %v54
    %v77 = vadd.f32 %v75, %v76
    %78 = vst [vmem:[%s74] sm:$0xff] %v77
    // Predicated region
    $region22: #{tpu_custom_call.1} parent=1 // pred_check
      _
    $region23: #{tpu_custom_call.1} parent=1 // pred_check_branch
      %80 = sbr.rel (0) target = $region25
    $region24: #{tpu_custom_call.1} parent=1 // pred_region
      %82 = vsyncadd [#allocation4], 0
      %s83 = sshll.u32 [#allocation7], 4
      %s84 = int_to_ptr.vmem [resolvable:$true] %s83
      %s85 = sshll.u32 %s2, 4
      %s86 = int_to_ptr.hbm [resolvable:$true] %s85
      %91 = dma.vmem_to_hbm [thread:$0]  %s84, 384, %s86, [#allocation4], 128, 128, 8
    $region25: #{tpu_custom_call.1} parent=1 // pred_fallthru
      _
    // Predicated region
    $region26: #{tpu_custom_call.1} parent=1 // pred_check
      _
    $region27: #{tpu_custom_call.1} parent=1 // pred_check_branch
      %93 = sbr.rel (0) target = $region29
    $region28: #{tpu_custom_call.1} parent=1 // pred_region
      %95 = dma.done [#allocation4], 384
    $region29: #{tpu_custom_call.1} parent=1 // pred_fallthru
      _
    %96 = vsyncpa [#allocation3], 1
    %97 = vsyncpa [#allocation6], 1
    %98 = vsyncpa [#allocation4], 1

</llo_original>
